<compile_context>
chip_gen: v7x
topology: tpu7x:2x2x1
jax: 0.10.0
libtpu: 0.0.40
codegen_flags: <defaults>
</compile_context>

<pallas_src>
import jax
import jax.numpy as jnp
from jax.experimental import pallas as pl
from jax.experimental.pallas import tpu as pltpu

NB_OBSES = 4      # CartPole-v0 observation_space.shape == (4,)
NB_ACTIONS = 2    # CartPole-v0 action_space.n == 2
HIDDEN = 64
_LANE = 128
MAX_TILE_B = 512  # (64, 512) f32 hidden tile = 32 vregs; well under the 64-vreg file.

assert NB_ACTIONS == 2  # sigmoid-of-logit-difference trick below relies on this


def _round_up(n, m):
    return (n + m - 1) // m * m


def actor_kernel(xt_ref, w1t_ref, b1t_ref, wd_ref, bd_ref, out_ref):
    """One batch tile in transposed layout (batch on the lane axis).

    xt_ref : (NB_OBSES, TILE_B)   observations, transposed
    w1t_ref: (HIDDEN, NB_OBSES)   layer-1 weight, (out, in) layout
    b1t_ref: (HIDDEN, 1)          layer-1 bias as a column
    wd_ref : (HIDDEN, 1)          w2[:, 0] - w2[:, 1]
    bd_ref : (1, 1)               b2[0] - b2[1]
    out_ref: (NB_ACTIONS, TILE_B) action probabilities, transposed
    """
    xt = xt_ref[...]
    w1t = w1t_ref[...]

    # Layer 1: hT = W1 @ xT + b1 as 4 broadcast-FMA steps on the VPU
    # (a K=4 MXU matmul would be >96% zero padding).
    h = w1t[:, 0:1] * xt[0:1, :]
    for k in range(1, NB_OBSES):
        h = h + w1t[:, k:k + 1] * xt[k:k + 1, :]
    h = jnp.tanh(h + b1t_ref[...])                                     # (HIDDEN, TILE_B)

    # Layer 2 + 2-way softmax: d = logit0 - logit1 (sublane reduction),
    # p0 = sigmoid(d) via tanh on the EUP, p1 = 1 - p0.
    d = jnp.sum(wd_ref[...] * h, axis=0, keepdims=True) + bd_ref[...]  # (1, TILE_B)
    p0 = 0.5 * (1.0 + jnp.tanh(0.5 * d))
    out_ref[...] = jnp.concatenate([p0, 1.0 - p0], axis=0)             # lane-dense store


@jax.jit
def network_actor_forward(x, w1, b1, w2, b2):
    """x: (B, NB_OBSES) f32; weights in (in, out) layout -> probs (B, NB_ACTIONS)."""
    B = x.shape[0]
    tile_b = min(MAX_TILE_B, _round_up(B, _LANE))   # always a multiple of 128
    b_pad = _round_up(B, tile_b)

    # Wrapper-side layout plumbing (cheap XLA ops, done once per call):
    xt = jnp.pad(x, ((0, b_pad - B), (0, 0))).T                  # (NB_OBSES, b_pad)
    w1t = w1.T                                                   # (HIDDEN, NB_OBSES)
    b1t = b1.reshape(1, HIDDEN).T                                # (HIDDEN, 1)
    w_diff = (w2[:, 0] - w2[:, 1]).reshape(HIDDEN, 1)            # (HIDDEN, 1)
    b_diff = (b2.reshape(-1)[0] - b2.reshape(-1)[1]).reshape(1, 1)

    out_t = pl.pallas_call(
        actor_kernel,
        out_shape=jax.ShapeDtypeStruct((NB_ACTIONS, b_pad), jnp.float32),
        grid=(b_pad // tile_b,),
        in_specs=[
            pl.BlockSpec((NB_OBSES, tile_b), lambda i: (0, i)),    # x tile, pipelined
            pl.BlockSpec((HIDDEN, NB_OBSES), lambda i: (0, 0)),    # weights resident
            pl.BlockSpec((HIDDEN, 1), lambda i: (0, 0)),
            pl.BlockSpec((HIDDEN, 1), lambda i: (0, 0)),
            pl.BlockSpec((1, 1), lambda i: (0, 0)),
        ],
        out_specs=pl.BlockSpec((NB_ACTIONS, tile_b), lambda i: (0, i)),
        compiler_params=pltpu.CompilerParams(
            dimension_semantics=("parallel",),   # shard batch tiles across v7x's 2 TCs
        ),
    )(xt, w1t, b1t, w_diff, b_diff)

    return out_t.T[:B, :]                                         # (B, NB_ACTIONS)


def init_params(key):
    """Deterministic init mimicking torch Linear's U(-1/sqrt(fan_in), +1/sqrt(fan_in))."""
    k1, k2, k3, k4 = jax.random.split(key, 4)
    lim1 = 1.0 / jnp.sqrt(jnp.float32(NB_OBSES))
    lim2 = 1.0 / jnp.sqrt(jnp.float32(HIDDEN))
    # Stored as (in, out) — transposed relative to torch's (out, in).
    w1 = jax.random.uniform(k1, (NB_OBSES, HIDDEN), jnp.float32, -lim1, lim1)
    b1 = jax.random.uniform(k2, (1, HIDDEN), jnp.float32, -lim1, lim1)
    w2 = jax.random.uniform(k3, (HIDDEN, NB_ACTIONS), jnp.float32, -lim2, lim2)
    b2 = jax.random.uniform(k4, (1, NB_ACTIONS), jnp.float32, -lim2, lim2)
    return w1, b1, w2, b2


if __name__ == "__main__":
    key = jax.random.PRNGKey(0)
    pkey, xkey1, xkey2 = jax.random.split(key, 3)
    w1, b1, w2, b2 = init_params(pkey)

    def ref(xv):
        h = jnp.tanh(xv @ w1 + b1)
        return jax.nn.softmax(h @ w2 + b2, axis=-1)

    # Small per-env-step batch.
    B = 8
    x = jax.random.normal(xkey1, (B, NB_OBSES), jnp.float32)
    probs = jax.block_until_ready(network_actor_forward(x, w1, b1, w2, b2))
    assert probs.shape == (B, NB_ACTIONS)
    assert jnp.allclose(probs, ref(x), atol=1e-5), "mismatch vs JAX reference (B=8)"
    assert jnp.allclose(jnp.sum(probs, axis=-1), 1.0, atol=1e-5)

    # Larger ragged batch exercising multiple grid tiles and batch padding.
    B2 = 600
    x2 = jax.random.normal(xkey2, (B2, NB_OBSES), jnp.float32)
    probs2 = jax.block_until_ready(network_actor_forward(x2, w1, b1, w2, b2))
    assert probs2.shape == (B2, NB_ACTIONS)
    assert jnp.allclose(probs2, ref(x2), atol=1e-5), "mismatch vs JAX reference (B=600)"
    assert jnp.allclose(jnp.sum(probs2, axis=-1), 1.0, atol=1e-5)

    # TODO(synk): the torch `act()` helper (argmax + log-prob gather) is host-side
    # control flow, not part of forward(); do it in plain JAX on the returned probs.
    print("KERNEL_OK")
</pallas_src>

<mosaic_0001>
module attributes {stable_mosaic.version = 11 : i64} {
  func.func @actor_kernel(%arg0: i32, %arg1: memref<4x128xf32, #tpu.memory_space<vmem>>, %arg2: memref<64x4xf32, #tpu.memory_space<vmem>>, %arg3: memref<64x1xf32, #tpu.memory_space<vmem>>, %arg4: memref<64x1xf32, #tpu.memory_space<vmem>>, %arg5: memref<1x1xf32, #tpu.memory_space<vmem>>, %arg6: memref<2x128xf32, #tpu.memory_space<vmem>>) attributes {dimension_semantics = [#tpu.dimension_semantics<parallel>], iteration_bounds = array<i64: 1>, scalar_prefetch = 0 : i64, scratch_operands = 0 : i64, tpu.core_type = #tpu.core_type<tc>, window_params = [{transform_indices = @transform_0, window_bounds = array<i64: 4, 128>}, {pipeline_mode = #tpu.pipeline_mode<synchronous>, transform_indices = @transform_1, window_bounds = array<i64: 64, 4>}, {pipeline_mode = #tpu.pipeline_mode<synchronous>, transform_indices = @transform_2, window_bounds = array<i64: 64, 1>}, {pipeline_mode = #tpu.pipeline_mode<synchronous>, transform_indices = @transform_3, window_bounds = array<i64: 64, 1>}, {pipeline_mode = #tpu.pipeline_mode<synchronous>, transform_indices = @transform_4, window_bounds = array<i64: 1, 1>}, {transform_indices = @transform_5, window_bounds = array<i64: 2, 128>}]} {
    %c0 = arith.constant 0 : index
    %c0_0 = arith.constant 0 : index
    %0 = vector.load %arg1[%c0, %c0_0] : memref<4x128xf32, #tpu.memory_space<vmem>>, vector<4x128xf32>
    %c0_1 = arith.constant 0 : index
    %c0_2 = arith.constant 0 : index
    %1 = vector.load %arg2[%c0_1, %c0_2] : memref<64x4xf32, #tpu.memory_space<vmem>>, vector<64x4xf32>
    %2 = vector.extract_strided_slice %1 {offsets = [0, 0], sizes = [64, 1], strides = [1, 1]} : vector<64x4xf32> to vector<64x1xf32>
    %3 = vector.extract_strided_slice %0 {offsets = [0, 0], sizes = [1, 128], strides = [1, 1]} : vector<4x128xf32> to vector<1x128xf32>
    %4 = vector.broadcast %2 : vector<64x1xf32> to vector<64x128xf32>
    %5 = vector.broadcast %3 : vector<1x128xf32> to vector<64x128xf32>
    %6 = arith.mulf %4, %5 : vector<64x128xf32>
    %7 = vector.extract_strided_slice %1 {offsets = [0, 1], sizes = [64, 1], strides = [1, 1]} : vector<64x4xf32> to vector<64x1xf32>
    %8 = vector.extract_strided_slice %0 {offsets = [1, 0], sizes = [1, 128], strides = [1, 1]} : vector<4x128xf32> to vector<1x128xf32>
    %9 = vector.broadcast %7 : vector<64x1xf32> to vector<64x128xf32>
    %10 = vector.broadcast %8 : vector<1x128xf32> to vector<64x128xf32>
    %11 = arith.mulf %9, %10 : vector<64x128xf32>
    %12 = arith.addf %6, %11 : vector<64x128xf32>
    %13 = vector.extract_strided_slice %1 {offsets = [0, 2], sizes = [64, 1], strides = [1, 1]} : vector<64x4xf32> to vector<64x1xf32>
    %14 = vector.extract_strided_slice %0 {offsets = [2, 0], sizes = [1, 128], strides = [1, 1]} : vector<4x128xf32> to vector<1x128xf32>
    %15 = vector.broadcast %13 : vector<64x1xf32> to vector<64x128xf32>
    %16 = vector.broadcast %14 : vector<1x128xf32> to vector<64x128xf32>
    %17 = arith.mulf %15, %16 : vector<64x128xf32>
    %18 = arith.addf %12, %17 : vector<64x128xf32>
    %19 = vector.extract_strided_slice %1 {offsets = [0, 3], sizes = [64, 1], strides = [1, 1]} : vector<64x4xf32> to vector<64x1xf32>
    %20 = vector.extract_strided_slice %0 {offsets = [3, 0], sizes = [1, 128], strides = [1, 1]} : vector<4x128xf32> to vector<1x128xf32>
    %21 = vector.broadcast %19 : vector<64x1xf32> to vector<64x128xf32>
    %22 = vector.broadcast %20 : vector<1x128xf32> to vector<64x128xf32>
    %23 = arith.mulf %21, %22 : vector<64x128xf32>
    %24 = arith.addf %18, %23 : vector<64x128xf32>
    %c0_3 = arith.constant 0 : index
    %c0_4 = arith.constant 0 : index
    %25 = vector.load %arg3[%c0_3, %c0_4] : memref<64x1xf32, #tpu.memory_space<vmem>>, vector<64x1xf32>
    %26 = vector.broadcast %25 : vector<64x1xf32> to vector<64x128xf32>
    %27 = arith.addf %24, %26 : vector<64x128xf32>
    %28 = math.tanh %27 : vector<64x128xf32>
    %c0_5 = arith.constant 0 : index
    %c0_6 = arith.constant 0 : index
    %29 = vector.load %arg4[%c0_5, %c0_6] : memref<64x1xf32, #tpu.memory_space<vmem>>, vector<64x1xf32>
    %30 = vector.broadcast %29 : vector<64x1xf32> to vector<64x128xf32>
    %31 = arith.mulf %30, %28 : vector<64x128xf32>
    %cst = arith.constant dense<0.000000e+00> : vector<128xf32>
    %32 = vector.multi_reduction <add>, %31, %cst [0] : vector<64x128xf32> to vector<128xf32>
    %33 = vector.shape_cast %32 : vector<128xf32> to vector<1x128xf32>
    %c0_7 = arith.constant 0 : index
    %c0_8 = arith.constant 0 : index
    %34 = vector.load %arg5[%c0_7, %c0_8] : memref<1x1xf32, #tpu.memory_space<vmem>>, vector<1x1xf32>
    %35 = vector.broadcast %34 : vector<1x1xf32> to vector<1x128xf32>
    %36 = arith.addf %33, %35 : vector<1x128xf32>
    %cst_9 = arith.constant 5.000000e-01 : f32
    %37 = vector.broadcast %cst_9 : f32 to vector<1x128xf32>
    %38 = arith.mulf %37, %36 : vector<1x128xf32>
    %39 = math.tanh %38 : vector<1x128xf32>
    %cst_10 = arith.constant 1.000000e+00 : f32
    %40 = vector.broadcast %cst_10 : f32 to vector<1x128xf32>
    %41 = arith.addf %40, %39 : vector<1x128xf32>
    %cst_11 = arith.constant 5.000000e-01 : f32
    %42 = vector.broadcast %cst_11 : f32 to vector<1x128xf32>
    %43 = arith.mulf %42, %41 : vector<1x128xf32>
    %cst_12 = arith.constant 1.000000e+00 : f32
    %44 = vector.broadcast %cst_12 : f32 to vector<1x128xf32>
    %45 = arith.subf %44, %43 : vector<1x128xf32>
    %46 = tpu.concatenate %43, %45 in 0 : vector<1x128xf32>, vector<1x128xf32> -> vector<2x128xf32>
    %c0_13 = arith.constant 0 : index
    %c0_14 = arith.constant 0 : index
    %47 = vector.load %arg6[%c0_13, %c0_14] : memref<2x128xf32, #tpu.memory_space<vmem>>, vector<2x128xf32>
    tpu.vector_store %arg6[%c0_13, %c0_14], %46 {strides = array<i32>} : memref<2x128xf32, #tpu.memory_space<vmem>>, vector<2x128xf32>,
    return
  }
  func.func @transform_0(%arg0: i32) -> (i32, i32) {
    %c0_i32 = arith.constant 0 : i32
    %c0_i32_0 = arith.constant 0 : i32
    return %c0_i32, %arg0 : i32, i32
  }
  func.func @transform_1(%arg0: i32) -> (i32, i32) {
    %c0_i32 = arith.constant 0 : i32
    %c0_i32_0 = arith.constant 0 : i32
    %c0_i32_1 = arith.constant 0 : i32
    return %c0_i32, %c0_i32_0 : i32, i32
  }
  func.func @transform_2(%arg0: i32) -> (i32, i32) {
    %c0_i32 = arith.constant 0 : i32
    %c0_i32_0 = arith.constant 0 : i32
    %c0_i32_1 = arith.constant 0 : i32
    return %c0_i32, %c0_i32_0 : i32, i32
  }
  func.func @transform_3(%arg0: i32) -> (i32, i32) {
    %c0_i32 = arith.constant 0 : i32
    %c0_i32_0 = arith.constant 0 : i32
    %c0_i32_1 = arith.constant 0 : i32
    return %c0_i32, %c0_i32_0 : i32, i32
  }
  func.func @transform_4(%arg0: i32) -> (i32, i32) {
    %c0_i32 = arith.constant 0 : i32
    %c0_i32_0 = arith.constant 0 : i32
    %c0_i32_1 = arith.constant 0 : i32
    return %c0_i32, %c0_i32_0 : i32, i32
  }
  func.func @transform_5(%arg0: i32) -> (i32, i32) {
    %c0_i32 = arith.constant 0 : i32
    %c0_i32_0 = arith.constant 0 : i32
    return %c0_i32, %arg0 : i32, i32
  }
}

</mosaic_0001>

<llo_original>
// kernel: network_actor_forward.1
$region0: #{network_actor_forward.1}
  #allocation0 [shape = 'u32[]', space=smem, size = 0x4, offset = 0x4, fixed_abs, tag = 'smem constant byte address 0x4 - core index']
  #allocation1 [shape = 'u32[144,128]{1,0:T(1,128)}', space=vmem, size = 0x12000, scoped, tag = 'internal scratch']
  #allocation2 [shape = 'f32[1,1]{1,0:T(1,128)S(1)}', space=vmem, size = 0x200, scoped, tag = 'scoped memory for network_actor_forward.1']
  %s0 = inlined_call_operand.vmem [shape: f32[4,128], index: 0, kind: input, shape index: {}]
  %s1 = inlined_call_operand.vmem [shape: f32[64,4], index: 1, kind: input, shape index: {}]
  %s2 = inlined_call_operand.vmem [shape: f32[64,1], index: 2, kind: input, shape index: {}]
  %s3 = inlined_call_operand.vmem [shape: f32[64,1], index: 3, kind: input, shape index: {}]
  %s4 = inlined_call_operand.<no memory space> [shape: f32[1,1], index: 4, kind: input, shape index: {}]
  %s5 = inlined_call_operand.hbm [shape: f32[2,128], index: 5, kind: output, shape index: {}]
  %s6 = sld [smem:[#allocation0]]
  $region30: #{network_actor_forward.1} parent=0
    _
  %s8 = ssub.s32 1, %s6
  %s9 = scalar_select 0, %s8, %s6
  %v10 = vstv %s4
  %11 = vst [vmem:[#allocation2] sm:$0x1] %v10
  $region1: #{network_actor_forward.1} parent=0
    #allocation3 [shape = 'u8[1024]{0}', space=vmem, size = 0x400, scoped, tag = 'output window, operand 0, single buffered']
    #allocation4 [shape = 's32[1]{0}', space=sflag, size = 0x4, scoped, tag = 'scoped memory for network_actor_forward.1']
    %12 = vsyncpa [#allocation4], 0
    // Predicated region
    $region2: #{network_actor_forward.1} parent=1 // pred_check
      _
    $region3: #{network_actor_forward.1} parent=1 // pred_check_branch
      %14 = sbr.rel (0) target = $region5
    $region4: #{network_actor_forward.1} parent=1 // pred_region
      _
    $region5: #{network_actor_forward.1} parent=1 // pred_fallthru
      _
    // Predicated region
    $region6: #{network_actor_forward.1} parent=1 // pred_check
      _
    $region7: #{network_actor_forward.1} parent=1 // pred_check_branch
      %16 = sbr.rel (0) target = $region9
    $region8: #{network_actor_forward.1} parent=1 // pred_region
      _
    $region9: #{network_actor_forward.1} parent=1 // pred_fallthru
      _
    // Predicated region
    $region10: #{network_actor_forward.1} parent=1 // pred_check
      _
    $region11: #{network_actor_forward.1} parent=1 // pred_check_branch
      %18 = sbr.rel (0) target = $region13
    $region12: #{network_actor_forward.1} parent=1 // pred_region
      _
    $region13: #{network_actor_forward.1} parent=1 // pred_fallthru
      _
    // Predicated region
    $region14: #{network_actor_forward.1} parent=1 // pred_check
      _
    $region15: #{network_actor_forward.1} parent=1 // pred_check_branch
      %20 = sbr.rel (0) target = $region17
    $region16: #{network_actor_forward.1} parent=1 // pred_region
      _
    $region17: #{network_actor_forward.1} parent=1 // pred_fallthru
      _
    // Predicated region
    $region18: #{network_actor_forward.1} parent=1 // pred_check
      _
    $region19: #{network_actor_forward.1} parent=1 // pred_check_branch
      %22 = sbr.rel (0) target = $region21
    $region20: #{network_actor_forward.1} parent=1 // pred_region
      _
    $region21: #{network_actor_forward.1} parent=1 // pred_fallthru
      _
    %v23 = vld [vmem:[%s0] sm:$0xf]
    %v24 = vld [vmem:[%s1] sm:$0xff]
    %v25 = vld [vmem:[%s1 + $0x8] sm:$0xff]
    %v26 = vld [vmem:[%s1 + $0x10] sm:$0xff]
    %v27 = vld [vmem:[%s1 + $0x18] sm:$0xff]
    %v28 = vld [vmem:[%s1 + $0x20] sm:$0xff]
    %v29 = vld [vmem:[%s1 + $0x28] sm:$0xff]
    %v30 = vld [vmem:[%s1 + $0x30] sm:$0xff]
    %v31 = vld [vmem:[%s1 + $0x38] sm:$0xff]
    %33 = vset.pattern.permute.xlu0 0
    %34 = vperm.xlu0 %33, %v24
    %v35 = vpop.permute.xlu0 %34
    %38 = vset.pattern.permute.xlu0 0
    %39 = vperm.xlu0 %38, %v25
    %v40 = vpop.permute.xlu0 %39
    %43 = vset.pattern.permute.xlu0 0
    %44 = vperm.xlu0 %43, %v26
    %v45 = vpop.permute.xlu0 %44
    %48 = vset.pattern.permute.xlu0 0
    %49 = vperm.xlu0 %48, %v27
    %v50 = vpop.permute.xlu0 %49
    %53 = vset.pattern.permute.xlu0 0
    %54 = vperm.xlu0 %53, %v28
    %v55 = vpop.permute.xlu0 %54
    %58 = vset.pattern.permute.xlu0 0
    %59 = vperm.xlu0 %58, %v29
    %v60 = vpop.permute.xlu0 %59
    %63 = vset.pattern.permute.xlu0 0
    %64 = vperm.xlu0 %63, %v30
    %v65 = vpop.permute.xlu0 %64
    %68 = vset.pattern.permute.xlu0 0
    %69 = vperm.xlu0 %68, %v31
    %v70 = vpop.permute.xlu0 %69
    %v72 = vlaneseq
    %v73 = vshrl.u32 %v72, 7
    %v74 = vsub.s32 0, %v73
    %v75 = vrot.slane %v23, %v74
    %v76 = vmul.f32 %v35, %v75
    %v77 = vmul.f32 %v40, %v75
    %v78 = vmul.f32 %v45, %v75
    %v79 = vmul.f32 %v50, %v75
    %v80 = vmul.f32 %v55, %v75
    %v81 = vmul.f32 %v60, %v75
    %v82 = vmul.f32 %v65, %v75
    %v83 = vmul.f32 %v70, %v75
    %84 = vset.pattern.permute.xlu0 1
    %85 = vperm.xlu0 %84, %v24
    %v86 = vpop.permute.xlu0 %85
    %88 = vset.pattern.permute.xlu0 1
    %89 = vperm.xlu0 %88, %v25
    %v90 = vpop.permute.xlu0 %89
    %92 = vset.pattern.permute.xlu0 1
    %93 = vperm.xlu0 %92, %v26
    %v94 = vpop.permute.xlu0 %93
    %96 = vset.pattern.permute.xlu0 1
    %97 = vperm.xlu0 %96, %v27
    %v98 = vpop.permute.xlu0 %97
    %100 = vset.pattern.permute.xlu0 1
    %101 = vperm.xlu0 %100, %v28
    %v102 = vpop.permute.xlu0 %101
    %104 = vset.pattern.permute.xlu0 1
    %105 = vperm.xlu0 %104, %v29
    %v106 = vpop.permute.xlu0 %105
    %108 = vset.pattern.permute.xlu0 1
    %109 = vperm.xlu0 %108, %v30
    %v110 = vpop.permute.xlu0 %109
    %112 = vset.pattern.permute.xlu0 1
    %113 = vperm.xlu0 %112, %v31
    %v114 = vpop.permute.xlu0 %113
    %v116 = vlaneseq
    %v117 = vshrl.u32 %v116, 7
    %v118 = vsub.s32 1, %v117
    %v119 = vrot.slane %v23, %v118
    %v120 = vmul.f32 %v86, %v119
    %v121 = vmul.f32 %v90, %v119
    %v122 = vmul.f32 %v94, %v119
    %v123 = vmul.f32 %v98, %v119
    %v124 = vmul.f32 %v102, %v119
    %v125 = vmul.f32 %v106, %v119
    %v126 = vmul.f32 %v110, %v119
    %v127 = vmul.f32 %v114, %v119
    %v128 = vadd.f32 %v76, %v120
    %v129 = vadd.f32 %v77, %v121
    %v130 = vadd.f32 %v78, %v122
    %v131 = vadd.f32 %v79, %v123
    %v132 = vadd.f32 %v80, %v124
    %v133 = vadd.f32 %v81, %v125
    %v134 = vadd.f32 %v82, %v126
    %v135 = vadd.f32 %v83, %v127
    %136 = vset.pattern.permute.xlu0 2
    %137 = vperm.xlu0 %136, %v24
    %v138 = vpop.permute.xlu0 %137
    %140 = vset.pattern.permute.xlu0 2
    %141 = vperm.xlu0 %140, %v25
    %v142 = vpop.permute.xlu0 %141
    %144 = vset.pattern.permute.xlu0 2
    %145 = vperm.xlu0 %144, %v26
    %v146 = vpop.permute.xlu0 %145
    %148 = vset.pattern.permute.xlu0 2
    %149 = vperm.xlu0 %148, %v27
    %v150 = vpop.permute.xlu0 %149
    %152 = vset.pattern.permute.xlu0 2
    %153 = vperm.xlu0 %152, %v28
    %v154 = vpop.permute.xlu0 %153
    %156 = vset.pattern.permute.xlu0 2
    %157 = vperm.xlu0 %156, %v29
    %v158 = vpop.permute.xlu0 %157
    %160 = vset.pattern.permute.xlu0 2
    %161 = vperm.xlu0 %160, %v30
    %v162 = vpop.permute.xlu0 %161
    %164 = vset.pattern.permute.xlu0 2
    %165 = vperm.xlu0 %164, %v31
    %v166 = vpop.permute.xlu0 %165
    %v168 = vlaneseq
    %v169 = vshrl.u32 %v168, 7
    %v170 = vsub.s32 2, %v169
    %v171 = vrot.slane %v23, %v170
    %v172 = vmul.f32 %v138, %v171
    %v173 = vmul.f32 %v142, %v171
    %v174 = vmul.f32 %v146, %v171
    %v175 = vmul.f32 %v150, %v171
    %v176 = vmul.f32 %v154, %v171
    %v177 = vmul.f32 %v158, %v171
    %v178 = vmul.f32 %v162, %v171
    %v179 = vmul.f32 %v166, %v171
    %v180 = vadd.f32 %v128, %v172
    %v181 = vadd.f32 %v129, %v173
    %v182 = vadd.f32 %v130, %v174
    %v183 = vadd.f32 %v131, %v175
    %v184 = vadd.f32 %v132, %v176
    %v185 = vadd.f32 %v133, %v177
    %v186 = vadd.f32 %v134, %v178
    %v187 = vadd.f32 %v135, %v179
    %188 = vset.pattern.permute.xlu0 3
    %189 = vperm.xlu0 %188, %v24
    %v190 = vpop.permute.xlu0 %189
    %192 = vset.pattern.permute.xlu0 3
    %193 = vperm.xlu0 %192, %v25
    %v194 = vpop.permute.xlu0 %193
    %196 = vset.pattern.permute.xlu0 3
    %197 = vperm.xlu0 %196, %v26
    %v198 = vpop.permute.xlu0 %197
    %200 = vset.pattern.permute.xlu0 3
    %201 = vperm.xlu0 %200, %v27
    %v202 = vpop.permute.xlu0 %201
    %204 = vset.pattern.permute.xlu0 3
    %205 = vperm.xlu0 %204, %v28
    %v206 = vpop.permute.xlu0 %205
    %208 = vset.pattern.permute.xlu0 3
    %209 = vperm.xlu0 %208, %v29
    %v210 = vpop.permute.xlu0 %209
    %212 = vset.pattern.permute.xlu0 3
    %213 = vperm.xlu0 %212, %v30
    %v214 = vpop.permute.xlu0 %213
    %216 = vset.pattern.permute.xlu0 3
    %217 = vperm.xlu0 %216, %v31
    %v218 = vpop.permute.xlu0 %217
    %v220 = vlaneseq
    %v221 = vshrl.u32 %v220, 7
    %v222 = vsub.s32 3, %v221
    %v223 = vrot.slane %v23, %v222
    %v224 = vmul.f32 %v190, %v223
    %v225 = vmul.f32 %v194, %v223
    %v226 = vmul.f32 %v198, %v223
    %v227 = vmul.f32 %v202, %v223
    %v228 = vmul.f32 %v206, %v223
    %v229 = vmul.f32 %v210, %v223
    %v230 = vmul.f32 %v214, %v223
    %v231 = vmul.f32 %v218, %v223
    %v232 = vadd.f32 %v180, %v224
    %v233 = vadd.f32 %v181, %v225
    %v234 = vadd.f32 %v182, %v226
    %v235 = vadd.f32 %v183, %v227
    %v236 = vadd.f32 %v184, %v228
    %v237 = vadd.f32 %v185, %v229
    %v238 = vadd.f32 %v186, %v230
    %v239 = vadd.f32 %v187, %v231
    %v240 = vld [vmem:[%s2] sm:$0xff]
    %v241 = vld [vmem:[%s2 + $0x8] sm:$0xff]
    %v242 = vld [vmem:[%s2 + $0x10] sm:$0xff]
    %v243 = vld [vmem:[%s2 + $0x18] sm:$0xff]
    %v244 = vld [vmem:[%s2 + $0x20] sm:$0xff]
    %v245 = vld [vmem:[%s2 + $0x28] sm:$0xff]
    %v246 = vld [vmem:[%s2 + $0x30] sm:$0xff]
    %v247 = vld [vmem:[%s2 + $0x38] sm:$0xff]
    %249 = vset.pattern.permute.xlu0 0
    %250 = vperm.xlu0 %249, %v240
    %v251 = vpop.permute.xlu0 %250
    %254 = vset.pattern.permute.xlu0 0
    %255 = vperm.xlu0 %254, %v241
    %v256 = vpop.permute.xlu0 %255
    %259 = vset.pattern.permute.xlu0 0
    %260 = vperm.xlu0 %259, %v242
    %v261 = vpop.permute.xlu0 %260
    %264 = vset.pattern.permute.xlu0 0
    %265 = vperm.xlu0 %264, %v243
    %v266 = vpop.permute.xlu0 %265
    %269 = vset.pattern.permute.xlu0 0
    %270 = vperm.xlu0 %269, %v244
    %v271 = vpop.permute.xlu0 %270
    %274 = vset.pattern.permute.xlu0 0
    %275 = vperm.xlu0 %274, %v245
    %v276 = vpop.permute.xlu0 %275
    %279 = vset.pattern.permute.xlu0 0
    %280 = vperm.xlu0 %279, %v246
    %v281 = vpop.permute.xlu0 %280
    %284 = vset.pattern.permute.xlu0 0
    %285 = vperm.xlu0 %284, %v247
    %v286 = vpop.permute.xlu0 %285
    %v288 = vadd.f32 %v232, %v251
    %v289 = vadd.f32 %v233, %v256
    %v290 = vadd.f32 %v234, %v261
    %v291 = vadd.f32 %v235, %v266
    %v292 = vadd.f32 %v236, %v271
    %v293 = vadd.f32 %v237, %v276
    %v294 = vadd.f32 %v238, %v281
    %v295 = vadd.f32 %v239, %v286
    %v296 = vtanh.pop %v288
    %v297 = vtanh.pop %v289
    %v298 = vtanh.pop %v290
    %v299 = vtanh.pop %v291
    %v300 = vtanh.pop %v292
    %v301 = vtanh.pop %v293
    %v302 = vtanh.pop %v294
    %v303 = vtanh.pop %v295
    %v304 = vld [vmem:[%s3] sm:$0xff]
    %v305 = vld [vmem:[%s3 + $0x8] sm:$0xff]
    %v306 = vld [vmem:[%s3 + $0x10] sm:$0xff]
    %v307 = vld [vmem:[%s3 + $0x18] sm:$0xff]
    %v308 = vld [vmem:[%s3 + $0x20] sm:$0xff]
    %v309 = vld [vmem:[%s3 + $0x28] sm:$0xff]
    %v310 = vld [vmem:[%s3 + $0x30] sm:$0xff]
    %v311 = vld [vmem:[%s3 + $0x38] sm:$0xff]
    %313 = vset.pattern.permute.xlu0 0
    %314 = vperm.xlu0 %313, %v304
    %v315 = vpop.permute.xlu0 %314
    %318 = vset.pattern.permute.xlu0 0
    %319 = vperm.xlu0 %318, %v305
    %v320 = vpop.permute.xlu0 %319
    %323 = vset.pattern.permute.xlu0 0
    %324 = vperm.xlu0 %323, %v306
    %v325 = vpop.permute.xlu0 %324
    %328 = vset.pattern.permute.xlu0 0
    %329 = vperm.xlu0 %328, %v307
    %v330 = vpop.permute.xlu0 %329
    %333 = vset.pattern.permute.xlu0 0
    %334 = vperm.xlu0 %333, %v308
    %v335 = vpop.permute.xlu0 %334
    %338 = vset.pattern.permute.xlu0 0
    %339 = vperm.xlu0 %338, %v309
    %v340 = vpop.permute.xlu0 %339
    %343 = vset.pattern.permute.xlu0 0
    %344 = vperm.xlu0 %343, %v310
    %v345 = vpop.permute.xlu0 %344
    %348 = vset.pattern.permute.xlu0 0
    %349 = vperm.xlu0 %348, %v311
    %v350 = vpop.permute.xlu0 %349
    %v352 = vmul.f32 %v315, %v296
    %v353 = vmul.f32 %v320, %v297
    %v354 = vmul.f32 %v325, %v298
    %v355 = vmul.f32 %v330, %v299
    %v356 = vmul.f32 %v335, %v300
    %v357 = vmul.f32 %v340, %v301
    %v358 = vmul.f32 %v345, %v302
    %v359 = vmul.f32 %v350, %v303
    %v360 = vadd.f32 %v352, %v353
    %v361 = vadd.f32 %v360, %v354
    %v362 = vadd.f32 %v361, %v355
    %v363 = vadd.f32 %v362, %v356
    %v364 = vadd.f32 %v363, %v357
    %v365 = vadd.f32 %v364, %v358
    %v366 = vadd.f32 %v365, %v359
    %v367 = vrot.slane %v366, 4
    %v368 = vadd.f32 %v366, %v367
    %v369 = vrot.slane %v368, 2
    %v370 = vadd.f32 %v368, %v369
    %v371 = vrot.slane %v370, 1
    %v372 = vadd.f32 %v370, %v371
    %v373 = vld [vmem:[#allocation2] sm:$0x1]
    %375 = vset.pattern.permute.xlu0 0
    %376 = vperm.xlu0 %375, %v373
    %v377 = vpop.permute.xlu0 %376
    %v379 = vlaneseq
    %v380 = vshrl.u32 %v379, 7
    %v381 = vsub.s32 0, %v380
    %v382 = vrot.slane %v377, %v381
    %v383 = vadd.f32 %v372, %v382
    %v384 = vmul.f32 %v383, 0.5
    %v385 = vtanh.pop %v384
    %v386 = vadd.f32 %v385, 1.0
    %v387 = vmul.f32 %v386, 0.5
    %v388 = vsub.f32 1.0, %v387
    %vm389 = vcmask 1040384
    %v390 = vsel %vm389, %v387, %v388
    %391 = vst [vmem:[#allocation3] sm:$0x3] %v390
    // Predicated region
    $region22: #{network_actor_forward.1} parent=1 // pred_check
      _
    $region23: #{network_actor_forward.1} parent=1 // pred_check_branch
      %393 = sbr.rel (0) target = $region25
    $region24: #{network_actor_forward.1} parent=1 // pred_region
      %s395 = ssub.s32 32, 32
      %396 = vsyncadd [#allocation4], %s395
      %s398 = sshll.u32 [#allocation3], 4
      %s399 = int_to_ptr.vmem [resolvable:$true] %s398
      %401 = dma.vmem_to_hbm [thread:$0]  %s399, 32, %s5, [#allocation4]
    $region25: #{network_actor_forward.1} parent=1 // pred_fallthru
      _
    // Predicated region
    $region26: #{network_actor_forward.1} parent=1 // pred_check
      _
    $region27: #{network_actor_forward.1} parent=1 // pred_check_branch
      %403 = sbr.rel (0) target = $region29
    $region28: #{network_actor_forward.1} parent=1 // pred_region
      %404 = dma.done [#allocation4], 32
    $region29: #{network_actor_forward.1} parent=1 // pred_fallthru
      _
    %405 = vsyncpa [#allocation4], 1

</llo_original>
